<compile_context>
chip_gen: v6e
topology: v6e:2x2x1
jax: 0.10.0
libtpu: 0.0.40
codegen_flags: <defaults>
</compile_context>

<pallas_src>
import functools

import jax
import jax.numpy as jnp
from jax.experimental import pallas as pl
from jax.experimental.pallas import tpu as pltpu

LANE = 128


def mlp_kernel(x_ref, w1_ref, b1_ref, w2_ref, b2_ref, w3_ref, b3_ref, o_ref):
    # fc1 + ReLU: cast x to bf16 in-kernel, accumulate in f32 on the MXU.
    x = x_ref[...].astype(jnp.bfloat16)
    h1 = jnp.dot(x, w1_ref[...], preferred_element_type=jnp.float32)
    h1 = jnp.maximum(h1 + b1_ref[...], 0.0)
    # fc2 + ReLU
    h2 = jnp.dot(h1.astype(jnp.bfloat16), w2_ref[...],
                 preferred_element_type=jnp.float32)
    h2 = jnp.maximum(h2 + b2_ref[...], 0.0)
    # fc3 (zero-padded to lane width 128) + sigmoid, bf16 lane-dense writeback.
    logits = jnp.dot(h2.astype(jnp.bfloat16), w3_ref[...],
                     preferred_element_type=jnp.float32)
    logits = logits + b3_ref[...]
    o_ref[...] = jax.nn.sigmoid(logits).astype(o_ref.dtype)


def _resident_spec(shape):
    """Weights/biases: constant block index -> stay resident in VMEM."""
    index_map = lambda i: (0,) * len(shape)
    try:
        # Single-buffer the resident operands (they never change block).
        return pl.BlockSpec(shape, index_map, pipeline_mode=pl.Buffered(1))
    except TypeError:
        return pl.BlockSpec(shape, index_map)


def _choose_tm(batch):
    """Largest batch tile dividing B that keeps >= 2 grid steps (v7x megacore)
    and stays far under the v5e/v7x scoped-VMEM defaults."""
    for tm in (2048, 1024, 512, 256, 128):
        if batch % tm == 0 and batch // tm >= 2:
            return tm
    if batch >= 16:
        # Two 8-aligned tiles so both v7x TensorCores get work.
        return ((pl.cdiv(batch, 2) + 7) // 8) * 8
    return 8


def prepare_params(w1, b1, w2, b2, w3, b3):
    """One-time packing: bf16 MXU weights, f32 biases, fc3 zero-padded to a
    lane-dense width of 128 (padded sigmoid(0)=0.5 columns sliced off later)."""
    H, out_dim = w3.shape
    out_pad = max(LANE, pl.cdiv(out_dim, LANE) * LANE)
    w3p = jnp.zeros((H, out_pad), jnp.float32).at[:, :out_dim].set(w3)
    b3p = jnp.zeros((1, out_pad), jnp.float32).at[:, :out_dim].set(
        b3.reshape(1, -1))
    params = (w1.astype(jnp.bfloat16), b1.reshape(1, -1).astype(jnp.float32),
              w2.astype(jnp.bfloat16), b2.reshape(1, -1).astype(jnp.float32),
              w3p.astype(jnp.bfloat16), b3p)
    return params, out_dim


@functools.partial(jax.jit, static_argnames=("tm", "out_dim"))
def _mlp_forward(x, w1b, b1, w2b, b2, w3b, b3p, *, tm, out_dim):
    B, D = x.shape
    H = w1b.shape[1]
    out_pad = w3b.shape[1]

    n_tiles = pl.cdiv(B, tm)
    Bp = n_tiles * tm
    xp = x if Bp == B else jnp.zeros((Bp, D), x.dtype).at[:B].set(x)

    # Advisory cost for XLA's scheduler around the custom call.
    weight_bytes = (D * H + H * H + H * out_pad) * 2 + (2 * H + out_pad) * 4
    cost = pl.CostEstimate(
        flops=2 * Bp * (D * H + H * H + H * out_pad),
        transcendentals=Bp * out_pad,                      # sigmoid exp
        bytes_accessed=Bp * D * 4 + Bp * out_pad * 2 + weight_bytes)

    # Per-step VMEM: double-buffered f32 x / bf16 out tiles + resident bf16
    # weights + f32 intermediates, plus headroom.  Explicit so scaling tm does
    # not silently exceed the v5e (16 MiB) / v7x (32 MiB) scoped defaults.
    vmem_limit = int(2 * tm * D * 4 + 2 * tm * out_pad * 2
                     + 4 * tm * H * 4 + weight_bytes) + (2 << 20)
    vmem_limit = min(vmem_limit, 100 * 1024 * 1024)

    out = pl.pallas_call(
        mlp_kernel,
        out_shape=jax.ShapeDtypeStruct((Bp, out_pad), jnp.bfloat16),
        grid=(n_tiles,),
        in_specs=[
            pl.BlockSpec((tm, D), lambda i: (i, 0)),   # x: tiled over batch
            _resident_spec(w1b.shape), _resident_spec(b1.shape),
            _resident_spec(w2b.shape), _resident_spec(b2.shape),
            _resident_spec(w3b.shape), _resident_spec(b3p.shape),
        ],
        out_specs=pl.BlockSpec((tm, out_pad), lambda i: (i, 0)),
        compiler_params=pltpu.CompilerParams(
            dimension_semantics=("parallel",),
            vmem_limit_bytes=vmem_limit),
        cost_estimate=cost,
    )(xp, w1b, b1, w2b, b2, w3b, b3p)

    # Strip batch padding + lane padding; return f32 like the PyTorch module.
    return out[:B, :out_dim].astype(jnp.float32)


def mlp_forward(x, prepared_params, out_dim, tm=None):
    if tm is None:
        tm = _choose_tm(x.shape[0])
    return _mlp_forward(x, *prepared_params, tm=tm, out_dim=out_dim)


def init_params(key, input_dim=128, hidden_dim=128, output_dim=2):
    # Deterministic init mimicking nn.Linear's U(-1/sqrt(fan_in), +1/sqrt(fan_in)).
    # Weights stored transposed vs. PyTorch, i.e. (in_dim, out_dim).
    k = jax.random.split(key, 6)

    def lin(kw, kb, fan_in, fan_out):
        bound = 1.0 / jnp.sqrt(fan_in)
        w = jax.random.uniform(kw, (fan_in, fan_out), jnp.float32, -bound, bound)
        b = jax.random.uniform(kb, (fan_out,), jnp.float32, -bound, bound)
        return w, b

    w1, b1 = lin(k[0], k[1], input_dim, hidden_dim)
    w2, b2 = lin(k[2], k[3], hidden_dim, hidden_dim)
    w3, b3 = lin(k[4], k[5], hidden_dim, output_dim)
    return w1, b1, w2, b2, w3, b3


if __name__ == "__main__":
    key = jax.random.PRNGKey(0)
    kx, kp = jax.random.split(key)

    B, INPUT_DIM, HIDDEN_DIM, OUTPUT_DIM = 16, 128, 128, 2
    x = jax.random.normal(kx, (B, INPUT_DIM), dtype=jnp.float32)
    raw = init_params(kp, INPUT_DIM, HIDDEN_DIM, OUTPUT_DIM)
    params, out_dim = prepare_params(*raw)

    out = mlp_forward(x, params, out_dim)
    out = jax.block_until_ready(out)

    # Pure-JAX f32 reference; bf16 MXU operands + bf16 writeback => loose tol.
    w1, b1, w2, b2, w3, b3 = raw
    h = jnp.maximum(x @ w1 + b1, 0.0)
    h = jnp.maximum(h @ w2 + b2, 0.0)
    ref = jax.nn.sigmoid(h @ w3 + b3)
    assert out.shape == (B, OUTPUT_DIM), out.shape
    err = float(jnp.max(jnp.abs(out - ref)))
    assert err < 2e-2, err

    print("KERNEL_OK")
</pallas_src>

<mosaic_0001>
module attributes {stable_mosaic.version = 11 : i64} {
  func.func @mlp_kernel(%arg0: i32, %arg1: memref<8x128xf32, #tpu.memory_space<vmem>>, %arg2: memref<128x128xbf16, #tpu.memory_space<vmem>>, %arg3: memref<1x128xf32, #tpu.memory_space<vmem>>, %arg4: memref<128x128xbf16, #tpu.memory_space<vmem>>, %arg5: memref<1x128xf32, #tpu.memory_space<vmem>>, %arg6: memref<128x128xbf16, #tpu.memory_space<vmem>>, %arg7: memref<1x128xf32, #tpu.memory_space<vmem>>, %arg8: memref<8x128xbf16, #tpu.memory_space<vmem>>) attributes {dimension_semantics = [#tpu.dimension_semantics<parallel>], iteration_bounds = array<i64: 2>, scalar_prefetch = 0 : i64, scratch_operands = 0 : i64, tpu.core_type = #tpu.core_type<tc>, window_params = [{transform_indices = @transform_0, window_bounds = array<i64: 8, 128>}, {pipeline_mode = #tpu.pipeline_mode<synchronous>, transform_indices = @transform_1, window_bounds = array<i64: 128, 128>}, {pipeline_mode = #tpu.pipeline_mode<synchronous>, transform_indices = @transform_2, window_bounds = array<i64: 1, 128>}, {pipeline_mode = #tpu.pipeline_mode<synchronous>, transform_indices = @transform_3, window_bounds = array<i64: 128, 128>}, {pipeline_mode = #tpu.pipeline_mode<synchronous>, transform_indices = @transform_4, window_bounds = array<i64: 1, 128>}, {pipeline_mode = #tpu.pipeline_mode<synchronous>, transform_indices = @transform_5, window_bounds = array<i64: 128, 128>}, {pipeline_mode = #tpu.pipeline_mode<synchronous>, transform_indices = @transform_6, window_bounds = array<i64: 1, 128>}, {transform_indices = @transform_7, window_bounds = array<i64: 8, 128>}]} {
    %c0 = arith.constant 0 : index
    %c0_0 = arith.constant 0 : index
    %0 = vector.load %arg1[%c0, %c0_0] : memref<8x128xf32, #tpu.memory_space<vmem>>, vector<8x128xf32>
    %1 = arith.truncf %0 : vector<8x128xf32> to vector<8x128xbf16>
    %c0_1 = arith.constant 0 : index
    %c0_2 = arith.constant 0 : index
    %2 = vector.load %arg2[%c0_1, %c0_2] : memref<128x128xbf16, #tpu.memory_space<vmem>>, vector<128x128xbf16>
    %cst = arith.constant dense<0.000000e+00> : vector<8x128xf32>
    %3 = tpu.matmul %1, %2, %cst {dimension_numbers = #tpu.dot_dimension_numbers<[1], [0], [0], [1], [0, 0, 1, 1], [], []>} : vector<8x128xbf16>, vector<128x128xbf16>, vector<8x128xf32> -> vector<8x128xf32>
    %c0_3 = arith.constant 0 : index
    %c0_4 = arith.constant 0 : index
    %4 = vector.load %arg3[%c0_3, %c0_4] : memref<1x128xf32, #tpu.memory_space<vmem>>, vector<1x128xf32>
    %5 = vector.broadcast %4 : vector<1x128xf32> to vector<8x128xf32>
    %6 = arith.addf %3, %5 : vector<8x128xf32>
    %cst_5 = arith.constant 0.000000e+00 : f32
    %7 = vector.broadcast %cst_5 : f32 to vector<8x128xf32>
    %8 = arith.maximumf %6, %7 : vector<8x128xf32>
    %9 = arith.truncf %8 : vector<8x128xf32> to vector<8x128xbf16>
    %c0_6 = arith.constant 0 : index
    %c0_7 = arith.constant 0 : index
    %10 = vector.load %arg4[%c0_6, %c0_7] : memref<128x128xbf16, #tpu.memory_space<vmem>>, vector<128x128xbf16>
    %cst_8 = arith.constant dense<0.000000e+00> : vector<8x128xf32>
    %11 = tpu.matmul %9, %10, %cst_8 {dimension_numbers = #tpu.dot_dimension_numbers<[1], [0], [0], [1], [0, 0, 1, 1], [], []>} : vector<8x128xbf16>, vector<128x128xbf16>, vector<8x128xf32> -> vector<8x128xf32>
    %c0_9 = arith.constant 0 : index
    %c0_10 = arith.constant 0 : index
    %12 = vector.load %arg5[%c0_9, %c0_10] : memref<1x128xf32, #tpu.memory_space<vmem>>, vector<1x128xf32>
    %13 = vector.broadcast %12 : vector<1x128xf32> to vector<8x128xf32>
    %14 = arith.addf %11, %13 : vector<8x128xf32>
    %cst_11 = arith.constant 0.000000e+00 : f32
    %15 = vector.broadcast %cst_11 : f32 to vector<8x128xf32>
    %16 = arith.maximumf %14, %15 : vector<8x128xf32>
    %17 = arith.truncf %16 : vector<8x128xf32> to vector<8x128xbf16>
    %c0_12 = arith.constant 0 : index
    %c0_13 = arith.constant 0 : index
    %18 = vector.load %arg6[%c0_12, %c0_13] : memref<128x128xbf16, #tpu.memory_space<vmem>>, vector<128x128xbf16>
    %cst_14 = arith.constant dense<0.000000e+00> : vector<8x128xf32>
    %19 = tpu.matmul %17, %18, %cst_14 {dimension_numbers = #tpu.dot_dimension_numbers<[1], [0], [0], [1], [0, 0, 1, 1], [], []>} : vector<8x128xbf16>, vector<128x128xbf16>, vector<8x128xf32> -> vector<8x128xf32>
    %c0_15 = arith.constant 0 : index
    %c0_16 = arith.constant 0 : index
    %20 = vector.load %arg7[%c0_15, %c0_16] : memref<1x128xf32, #tpu.memory_space<vmem>>, vector<1x128xf32>
    %21 = vector.broadcast %20 : vector<1x128xf32> to vector<8x128xf32>
    %22 = arith.addf %19, %21 : vector<8x128xf32>
    %23 = arith.negf %22 : vector<8x128xf32>
    %24 = math.exp %23 : vector<8x128xf32>
    %cst_17 = arith.constant 1.000000e+00 : f32
    %25 = vector.broadcast %cst_17 : f32 to vector<8x128xf32>
    %26 = arith.addf %25, %24 : vector<8x128xf32>
    %27 = arith.divf %25, %26 : vector<8x128xf32>
    %28 = arith.truncf %27 : vector<8x128xf32> to vector<8x128xbf16>
    %c0_18 = arith.constant 0 : index
    %c0_19 = arith.constant 0 : index
    %29 = vector.load %arg8[%c0_18, %c0_19] : memref<8x128xbf16, #tpu.memory_space<vmem>>, vector<8x128xbf16>
    tpu.vector_store %arg8[%c0_18, %c0_19], %28 {strides = array<i32>} : memref<8x128xbf16, #tpu.memory_space<vmem>>, vector<8x128xbf16>,
    return
  }
  func.func @transform_0(%arg0: i32) -> (i32, i32) {
    %c0_i32 = arith.constant 0 : i32
    %c0_i32_0 = arith.constant 0 : i32
    return %arg0, %c0_i32 : i32, i32
  }
  func.func @transform_1(%arg0: i32) -> (i32, i32) {
    %c0_i32 = arith.constant 0 : i32
    %c0_i32_0 = arith.constant 0 : i32
    %c0_i32_1 = arith.constant 0 : i32
    return %c0_i32, %c0_i32_0 : i32, i32
  }
  func.func @transform_2(%arg0: i32) -> (i32, i32) {
    %c0_i32 = arith.constant 0 : i32
    %c0_i32_0 = arith.constant 0 : i32
    %c0_i32_1 = arith.constant 0 : i32
    return %c0_i32, %c0_i32_0 : i32, i32
  }
  func.func @transform_3(%arg0: i32) -> (i32, i32) {
    %c0_i32 = arith.constant 0 : i32
    %c0_i32_0 = arith.constant 0 : i32
    %c0_i32_1 = arith.constant 0 : i32
    return %c0_i32, %c0_i32_0 : i32, i32
  }
  func.func @transform_4(%arg0: i32) -> (i32, i32) {
    %c0_i32 = arith.constant 0 : i32
    %c0_i32_0 = arith.constant 0 : i32
    %c0_i32_1 = arith.constant 0 : i32
    return %c0_i32, %c0_i32_0 : i32, i32
  }
  func.func @transform_5(%arg0: i32) -> (i32, i32) {
    %c0_i32 = arith.constant 0 : i32
    %c0_i32_0 = arith.constant 0 : i32
    %c0_i32_1 = arith.constant 0 : i32
    return %c0_i32, %c0_i32_0 : i32, i32
  }
  func.func @transform_6(%arg0: i32) -> (i32, i32) {
    %c0_i32 = arith.constant 0 : i32
    %c0_i32_0 = arith.constant 0 : i32
    %c0_i32_1 = arith.constant 0 : i32
    return %c0_i32, %c0_i32_0 : i32, i32
  }
  func.func @transform_7(%arg0: i32) -> (i32, i32) {
    %c0_i32 = arith.constant 0 : i32
    %c0_i32_0 = arith.constant 0 : i32
    return %arg0, %c0_i32 : i32, i32
  }
}

</mosaic_0001>

<llo_original>
// kernel: _mlp_forward.1
$region0: #{_mlp_forward.1}
  #allocation0 [shape = 'u32[]', space=smem, size = 0x4, offset = 0x4, fixed_abs, tag = 'smem constant byte address 0x4 - core index']
  #allocation1 [shape = 'u32[144,128]{1,0:T(1,128)}', space=vmem, size = 0x12000, scoped, tag = 'internal scratch']
  %s0 = inlined_call_operand.hbm [shape: f32[16,128], index: 0, kind: input, shape index: {}]
  %s1 = inlined_call_operand.hbm [shape: bf16[128,128], index: 1, kind: input, shape index: {}]
  %s2 = inlined_call_operand.vmem [shape: f32[1,128], index: 2, kind: input, shape index: {}]
  %s3 = inlined_call_operand.hbm [shape: bf16[128,128], index: 3, kind: input, shape index: {}]
  %s4 = inlined_call_operand.vmem [shape: f32[1,128], index: 4, kind: input, shape index: {}]
  %s5 = inlined_call_operand.hbm [shape: bf16[128,128], index: 5, kind: input, shape index: {}]
  %s6 = inlined_call_operand.vmem [shape: f32[1,128], index: 6, kind: input, shape index: {}]
  %s7 = inlined_call_operand.vmem [shape: bf16[16,128], index: 7, kind: output, shape index: {}]
  %s8 = sld [smem:[#allocation0]]
  $region77: #{_mlp_forward.1} parent=0
    _
  %s10 = ssub.s32 1, %s8
  %s11 = scalar_select 0, %s10, %s8
  $region1: #{_mlp_forward.1} parent=0
    #allocation2 [shape = 'u8[8192]{0}', space=vmem, size = 0x2000, scoped, tag = 'input window, operand 0']
    #allocation3 [shape = 's32[2]{0}', space=sflag, size = 0x8, scoped, tag = 'scoped memory for _mlp_forward.1']
    #allocation4 [shape = 'u8[32768]{0}', space=vmem, size = 0x8000, scoped, tag = 'input window, operand 1, single buffered']
    #allocation5 [shape = 's32[1]{0}', space=sflag, size = 0x4, scoped, tag = 'scoped memory for _mlp_forward.1']
    #allocation6 [shape = 'u8[32768]{0}', space=vmem, size = 0x8000, scoped, tag = 'input window, operand 3, single buffered']
    #allocation7 [shape = 'u8[32768]{0}', space=vmem, size = 0x8000, scoped, tag = 'input window, operand 5, single buffered']
    #allocation8 [shape = 's32[1]{0}', space=sflag, size = 0x4, scoped, tag = 'scoped memory for _mlp_forward.1']
    %12 = vsyncpa [#allocation3], 0
    %s13 = scalar_lea.sflag [#allocation3], 1
    %14 = vsyncpa %s13, 0
    %15 = vsyncpa [#allocation5], 0
    %16 = vsyncpa [#allocation8], 0
    loop: start=0, step=1, limit=4
    $region2: #{_mlp_forward.1} parent=1 // loop_pre_header
      _
    $region3: #{_mlp_forward.1} parent=1 // loop_header
      %s18 = sphi 0, %s22
      %p19 = scmp.ge.s32.totalorder %s18, 4
      %s28 = sphi 0, %s30
      %s31 = sphi 0, %s28
      %s32 = sphi 0, %s31
      %s48 = sphi 0, %s32
      %s52 = sphi 0, %s52
      %s54 = sphi 0, %s52
      %s55 = sphi 0, %s54
      %s69 = sphi 0, %s55
      %s73 = sphi 0, %s73
      %s75 = sphi 0, %s73
      %s76 = sphi 0, %s75
      %s90 = sphi 0, %s76
      %s94 = sphi 0, %s94
      %s96 = sphi 0, %s94
      %s97 = sphi 0, %s96
      %s111 = sphi 0, %s97
      %s115 = sphi 0, %s115
      %s117 = sphi 0, %s115
      %s118 = sphi 0, %s117
      %s132 = sphi 0, %s118
      %s136 = sphi 0, %s136
      %s138 = sphi 0, %s136
      %s139 = sphi 0, %s138
      %s153 = sphi 0, %s139
      %s157 = sphi 0, %s157
      %s159 = sphi 0, %s157
      %s160 = sphi 0, %s159
      %s174 = sphi 0, %s160
      %s180 = sphi 0, %s182
      %s183 = sphi 0, %s180
      %s184 = sphi 0, %s183
      %s200 = sphi 0, %s184
    $region4: #{_mlp_forward.1} parent=1 // loop_header_branch
      %21 = sbr.rel (%p19) target = $region8
    $region5: #{_mlp_forward.1} parent=1 // loop_body
      %s23 = ssub.s32 %s18, 1
      %s24 = ssub.s32 %s18, 2
      %s25 = sadd.s32 %s18, 1
      %s26 = ssub.s32 %s18, %s25
      %p27 = scmp.eq.s32.totalorder %s26, 0
      %s29 = sadd.s32 %s28, 1
      %s30 = scalar_select %p27, %s28, %s29
      %p33 = pneg %p27
      %p34 = scmp.eq.s32.totalorder %s18, 1
      %p35 = por %p33, %p34
      %p36 = scmp.ne.s32.totalorder %s28, %s31
      %p37 = scmp.eq.s32.totalorder %s18, 0
      %p38 = por %p36, %p37
      %p39 = scmp.ne.s32.totalorder %s28, %s31
      %p40 = scmp.eq.s32.totalorder %s23, 1
      %p41 = por %p39, %p40
      %p42 = scmp.ne.s32.totalorder %s31, %s32
      %p43 = scmp.eq.s32.totalorder %s23, 0
      %p44 = por %p42, %p43
      %p45 = scmp.ne.s32.totalorder %s31, %s32
      %p46 = scmp.eq.s32.totalorder %s24, 1
      %p47 = por %p45, %p46
      %p49 = scmp.ne.s32.totalorder %s32, %s48
      %p50 = scmp.eq.s32.totalorder %s24, 0
      %p51 = por %p49, %p50
      %s53 = sadd.s32 %s52, 1
      %p56 = scmp.eq.s32.totalorder %s18, 1
      %p57 = scmp.ne.s32.totalorder %s52, %s54
      %p58 = scmp.eq.s32.totalorder %s18, 0
      %p59 = por %p57, %p58
      %p60 = scmp.ne.s32.totalorder %s52, %s54
      %p61 = scmp.eq.s32.totalorder %s23, 1
      %p62 = por %p60, %p61
      %p63 = scmp.ne.s32.totalorder %s54, %s55
      %p64 = scmp.eq.s32.totalorder %s23, 0
      %p65 = por %p63, %p64
      %p66 = scmp.ne.s32.totalorder %s54, %s55
      %p67 = scmp.eq.s32.totalorder %s24, 1
      %p68 = por %p66, %p67
      %p70 = scmp.ne.s32.totalorder %s55, %s69
      %p71 = scmp.eq.s32.totalorder %s24, 0
      %p72 = por %p70, %p71
      %s74 = sadd.s32 %s73, 1
      %p77 = scmp.eq.s32.totalorder %s18, 1
      %p78 = scmp.ne.s32.totalorder %s73, %s75
      %p79 = scmp.eq.s32.totalorder %s18, 0
      %p80 = por %p78, %p79
      %p81 = scmp.ne.s32.totalorder %s73, %s75
      %p82 = scmp.eq.s32.totalorder %s23, 1
      %p83 = por %p81, %p82
      %p84 = scmp.ne.s32.totalorder %s75, %s76
      %p85 = scmp.eq.s32.totalorder %s23, 0
      %p86 = por %p84, %p85
      %p87 = scmp.ne.s32.totalorder %s75, %s76
      %p88 = scmp.eq.s32.totalorder %s24, 1
      %p89 = por %p87, %p88
      %p91 = scmp.ne.s32.totalorder %s76, %s90
      %p92 = scmp.eq.s32.totalorder %s24, 0
      %p93 = por %p91, %p92
      %s95 = sadd.s32 %s94, 1
      %p98 = scmp.eq.s32.totalorder %s18, 1
      %p99 = scmp.ne.s32.totalorder %s94, %s96
      %p100 = scmp.eq.s32.totalorder %s18, 0
      %p101 = por %p99, %p100
      %p102 = scmp.ne.s32.totalorder %s94, %s96
      %p103 = scmp.eq.s32.totalorder %s23, 1
      %p104 = por %p102, %p103
      %p105 = scmp.ne.s32.totalorder %s96, %s97
      %p106 = scmp.eq.s32.totalorder %s23, 0
      %p107 = por %p105, %p106
      %p108 = scmp.ne.s32.totalorder %s96, %s97
      %p109 = scmp.eq.s32.totalorder %s24, 1
      %p110 = por %p108, %p109
      %p112 = scmp.ne.s32.totalorder %s97, %s111
      %p113 = scmp.eq.s32.totalorder %s24, 0
      %p114 = por %p112, %p113
      %s116 = sadd.s32 %s115, 1
      %p119 = scmp.eq.s32.totalorder %s18, 1
      %p120 = scmp.ne.s32.totalorder %s115, %s117
      %p121 = scmp.eq.s32.totalorder %s18, 0
      %p122 = por %p120, %p121
      %p123 = scmp.ne.s32.totalorder %s115, %s117
      %p124 = scmp.eq.s32.totalorder %s23, 1
      %p125 = por %p123, %p124
      %p126 = scmp.ne.s32.totalorder %s117, %s118
      %p127 = scmp.eq.s32.totalorder %s23, 0
      %p128 = por %p126, %p127
      %p129 = scmp.ne.s32.totalorder %s117, %s118
      %p130 = scmp.eq.s32.totalorder %s24, 1
      %p131 = por %p129, %p130
      %p133 = scmp.ne.s32.totalorder %s118, %s132
      %p134 = scmp.eq.s32.totalorder %s24, 0
      %p135 = por %p133, %p134
      %s137 = sadd.s32 %s136, 1
      %p140 = scmp.eq.s32.totalorder %s18, 1
      %p141 = scmp.ne.s32.totalorder %s136, %s138
      %p142 = scmp.eq.s32.totalorder %s18, 0
      %p143 = por %p141, %p142
      %p144 = scmp.ne.s32.totalorder %s136, %s138
      %p145 = scmp.eq.s32.totalorder %s23, 1
      %p146 = por %p144, %p145
      %p147 = scmp.ne.s32.totalorder %s138, %s139
      %p148 = scmp.eq.s32.totalorder %s23, 0
      %p149 = por %p147, %p148
      %p150 = scmp.ne.s32.totalorder %s138, %s139
      %p151 = scmp.eq.s32.totalorder %s24, 1
      %p152 = por %p150, %p151
      %p154 = scmp.ne.s32.totalorder %s139, %s153
      %p155 = scmp.eq.s32.totalorder %s24, 0
      %p156 = por %p154, %p155
      %s158 = sadd.s32 %s157, 1
      %p161 = scmp.eq.s32.totalorder %s18, 1
      %p162 = scmp.ne.s32.totalorder %s157, %s159
      %p163 = scmp.eq.s32.totalorder %s18, 0
      %p164 = por %p162, %p163
      %p165 = scmp.ne.s32.totalorder %s157, %s159
      %p166 = scmp.eq.s32.totalorder %s23, 1
      %p167 = por %p165, %p166
      %p168 = scmp.ne.s32.totalorder %s159, %s160
      %p169 = scmp.eq.s32.totalorder %s23, 0
      %p170 = por %p168, %p169
      %p171 = scmp.ne.s32.totalorder %s159, %s160
      %p172 = scmp.eq.s32.totalorder %s24, 1
      %p173 = por %p171, %p172
      %p175 = scmp.ne.s32.totalorder %s160, %s174
      %p176 = scmp.eq.s32.totalorder %s24, 0
      %p177 = por %p175, %p176
      %s178 = ssub.s32 %s18, %s25
      %p179 = scmp.eq.s32.totalorder %s178, 0
      %s181 = sadd.s32 %s180, 1
      %s182 = scalar_select %p179, %s180, %s181
      %p185 = pneg %p179
      %p186 = scmp.eq.s32.totalorder %s18, 1
      %p187 = por %p185, %p186
      %p188 = scmp.ne.s32.totalorder %s180, %s183
      %p189 = scmp.eq.s32.totalorder %s18, 0
      %p190 = por %p188, %p189
      %p191 = scmp.ne.s32.totalorder %s180, %s183
      %p192 = scmp.eq.s32.totalorder %s23, 1
      %p193 = por %p191, %p192
      %p194 = scmp.ne.s32.totalorder %s183, %s184
      %p195 = scmp.eq.s32.totalorder %s23, 0
      %p196 = por %p194, %p195
      %p197 = scmp.ne.s32.totalorder %s183, %s184
      %p198 = scmp.eq.s32.totalorder %s24, 1
      %p199 = por %p197, %p198
      %p201 = scmp.ne.s32.totalorder %s184, %s200
      %p202 = scmp.eq.s32.totalorder %s24, 0
      %p203 = por %p201, %p202
      %p204 = scmp.le.s32.totalorder 1, %s18
      %p205 = scmp.lt.s32.totalorder %s18, 3
      %p206 = pnand %p204, %p205
      %p207 = pneg %p206
      // Predicated region
      $region9: #{_mlp_forward.1} parent=5 // pred_check
        _
      $region10: #{_mlp_forward.1} parent=5 // pred_check_branch
        %209 = sbr.rel (%p206) target = $region12
      $region11: #{_mlp_forward.1} parent=5 // pred_region
        %s210 = ssub.s32 %s18, 1
        // Predicated region
        $region13: #{_mlp_forward.1} parent=11 // pred_check
          %p211 = pneg %p65
        $region14: #{_mlp_forward.1} parent=11 // pred_check_branch
          %213 = sbr.rel (%p211) target = $region16
        $region15: #{_mlp_forward.1} parent=11 // pred_region
          %s215 = ssub.s32 1024, 1024
          %216 = vsyncadd [#allocation5], %s215
          %s217 = sshll.u32 [#allocation4], 4
          %s218 = int_to_ptr.vmem [resolvable:$true] %s217
          %223 = dma.hbm_to_vmem [thread:$0]  %s1, 1024, %s218, [#allocation5], 64, 64, 4
        $region16: #{_mlp_forward.1} parent=11 // pred_fallthru
          _
        // Predicated region
        $region17: #{_mlp_forward.1} parent=11 // pred_check
          %p224 = pneg %p86
        $region18: #{_mlp_forward.1} parent=11 // pred_check_branch
          %226 = sbr.rel (%p224) target = $region20
        $region19: #{_mlp_forward.1} parent=11 // pred_region
          _
        $region20: #{_mlp_forward.1} parent=11 // pred_fallthru
          _
        // Predicated region
        $region21: #{_mlp_forward.1} parent=11 // pred_check
          %p227 = pneg %p107
        $region22: #{_mlp_forward.1} parent=11 // pred_check_branch
          %229 = sbr.rel (%p227) target = $region24
        $region23: #{_mlp_forward.1} parent=11 // pred_region
          %s231 = ssub.s32 1024, 1024
          %232 = vsyncadd [#allocation5], %s231
          %s233 = sshll.u32 [#allocation6], 4
          %s234 = int_to_ptr.vmem [resolvable:$true] %s233
          %239 = dma.hbm_to_vmem [thread:$0]  %s3, 1024, %s234, [#allocation5], 64, 64, 4
        $region24: #{_mlp_forward.1} parent=11 // pred_fallthru
          _
        // Predicated region
        $region25: #{_mlp_forward.1} parent=11 // pred_check
          %p240 = pneg %p128
        $region26: #{_mlp_forward.1} parent=11 // pred_check_branch
          %242 = sbr.rel (%p240) target = $region28
        $region27: #{_mlp_forward.1} parent=11 // pred_region
          _
        $region28: #{_mlp_forward.1} parent=11 // pred_fallthru
          _
        // Predicated region
        $region29: #{_mlp_forward.1} parent=11 // pred_check
          %p243 = pneg %p149
        $region30: #{_mlp_forward.1} parent=11 // pred_check_branch
          %245 = sbr.rel (%p243) target = $region32
        $region31: #{_mlp_forward.1} parent=11 // pred_region
          %s247 = ssub.s32 1024, 1024
          %248 = vsyncadd [#allocation8], %s247
          %s249 = sshll.u32 [#allocation7], 4
          %s250 = int_to_ptr.vmem [resolvable:$true] %s249
          %255 = dma.hbm_to_vmem [thread:$0]  %s5, 1024, %s250, [#allocation8], 64, 64, 4
        $region32: #{_mlp_forward.1} parent=11 // pred_fallthru
          _
        // Predicated region
        $region33: #{_mlp_forward.1} parent=11 // pred_check
          %p256 = pneg %p170
        $region34: #{_mlp_forward.1} parent=11 // pred_check_branch
          %258 = sbr.rel (%p256) target = $region36
        $region35: #{_mlp_forward.1} parent=11 // pred_region
          _
        $region36: #{_mlp_forward.1} parent=11 // pred_fallthru
          _
      $region12: #{_mlp_forward.1} parent=5 // pred_fallthru
        _
      %p259 = scmp.lt.s32.totalorder %s18, 2
      // Predicated region
      $region37: #{_mlp_forward.1} parent=5 // pred_check
        %p260 = pneg %p259
      $region38: #{_mlp_forward.1} parent=5 // pred_check_branch
        %262 = sbr.rel (%p260) target = $region40
      $region39: #{_mlp_forward.1} parent=5 // pred_region
        // Predicated region
        $region41: #{_mlp_forward.1} parent=39 // pred_check
          %p263 = pneg %p38
        $region42: #{_mlp_forward.1} parent=39 // pred_check_branch
          %265 = sbr.rel (%p263) target = $region44
        $region43: #{_mlp_forward.1} parent=39 // pred_region
          %s266 = sand.u32 %s28, 1
          %s267 = scalar_lea.sflag [#allocation3], %s266
          %s268 = sand.u32 %s28, 1
          %s269 = smul.addr %s268, 8
          %s270 = scalar_lea.vmem [#allocation2], %s269
          %s272 = ssub.s32 128, 128
          %273 = vsyncadd %s267, %s272
          %s274 = smul.addr %s18, 128
          %s275 = scalar_lea.hbm %s0, %s274
          %s277 = sshll.u32 %s270, 4
          %s278 = int_to_ptr.vmem [resolvable:$true] %s277
          %280 = dma.hbm_to_vmem [thread:$0]  %s275, 128, %s278, %s267
        $region44: #{_mlp_forward.1} parent=39 // pred_fallthru
          _
      $region40: #{_mlp_forward.1} parent=5 // pred_fallthru
        _
      %p281 = scmp.le.s32.totalorder 1, %s18
      %p282 = scmp.lt.s32.totalorder %s18, 3
      %p283 = pnand %p281, %p282
      %p284 = pneg %p283
      // Predicated region
      $region45: #{_mlp_forward.1} parent=5 // pred_check
        _
      $region46: #{_mlp_forward.1} parent=5 // pred_check_branch
        %286 = sbr.rel (%p283) target = $region48
      $region47: #{_mlp_forward.1} parent=5 // pred_region
        %s287 = ssub.s32 %s18, 1
        %s288 = sand.u32 %s31, 1
        %s289 = scalar_lea.sflag [#allocation3], %s288
        %s290 = sand.u32 %s31, 1
        %s291 = smul.addr %s290, 8
        %s292 = scalar_lea.vmem [#allocation2], %s291
        // Predicated region
        $region49: #{_mlp_forward.1} parent=47 // pred_check
          %p293 = pneg %p44
        $region50: #{_mlp_forward.1} parent=47 // pred_check_branch
          %295 = sbr.rel (%p293) target = $region52
        $region51: #{_mlp_forward.1} parent=47 // pred_region
          %296 = dma.done %s289, 128
        $region52: #{_mlp_forward.1} parent=47 // pred_fallthru
          _
        // Predicated region
        $region53: #{_mlp_forward.1} parent=47 // pred_check
          %p297 = pneg %p65
        $region54: #{_mlp_forward.1} parent=47 // pred_check_branch
          %299 = sbr.rel (%p297) target = $region56
        $region55: #{_mlp_forward.1} parent=47 // pred_region
          %300 = dma.done [#allocation5], 1024
        $region56: #{_mlp_forward.1} parent=47 // pred_fallthru
          _
        // Predicated region
        $region57: #{_mlp_forward.1} parent=47 // pred_check
          %p301 = pneg %p107
        $region58: #{_mlp_forward.1} parent=47 // pred_check_branch
          %303 = sbr.rel (%p301) target = $region60
        $region59: #{_mlp_forward.1} parent=47 // pred_region
          %304 = dma.done [#allocation5], 1024
        $region60: #{_mlp_forward.1} parent=47 // pred_fallthru
          _
        // Predicated region
        $region61: #{_mlp_forward.1} parent=47 // pred_check
          %p305 = pneg %p149
        $region62: #{_mlp_forward.1} parent=47 // pred_check_branch
          %307 = sbr.rel (%p305) target = $region64
        $region63: #{_mlp_forward.1} parent=47 // pred_region
          %308 = dma.done [#allocation8], 1024
        $region64: #{_mlp_forward.1} parent=47 // pred_fallthru
          _
        %s309 = sand.u32 %s31, 1
        %s310 = scalar_lea.sflag [#allocation3], %s309
        %s311 = sand.u32 %s31, 1
        %s312 = smul.addr %s311, 8
        %s313 = scalar_lea.vmem [#allocation2], %s312
        %p314 = pneg %p44
        %p315 = pneg %p41
        %p316 = pneg %p65
        %p317 = pneg %p62
        %p318 = pneg %p86
        %p319 = pneg %p83
        %p320 = pneg %p107
        %p321 = pneg %p104
        %p322 = pneg %p128
        %p323 = pneg %p125
        %p324 = pneg %p149
        %p325 = pneg %p146
        %p326 = pneg %p170
        %p327 = pneg %p167
        %p328 = pneg %p196
        %p329 = pneg %p193
        %p330 = scmp.lt.s32.totalorder %s23, 1
        %s331 = scalar_select %p330, %s23, 1
        %s332 = smul.addr %s331, 4
        %s333 = scalar_lea.vmem %s7, %s332
        %p334 = scmp.lt.s32.totalorder %s23, 1
        %s335 = scalar_select %p334, %s23, 1
        %s336 = smul.addr %s335, 4
        %s337 = scalar_lea.vmem %s7, %s336
        %v339 = vld [vmem:[%s292] sm:$0xff]
        %v340 = vpack.c.bf16 %v339, %v339
        %v341 = vld [vmem:[#allocation4] sm:$0xf]
        %v342 = vld [vmem:[#allocation4 + $0x4] sm:$0xf]
        %v343 = vld [vmem:[#allocation4 + $0x8] sm:$0xf]
        %v344 = vld [vmem:[#allocation4 + $0xc] sm:$0xf]
        %v345 = vld [vmem:[#allocation4 + $0x10] sm:$0xf]
        %v346 = vld [vmem:[#allocation4 + $0x14] sm:$0xf]
        %v347 = vld [vmem:[#allocation4 + $0x18] sm:$0xf]
        %v348 = vld [vmem:[#allocation4 + $0x1c] sm:$0xf]
        %v349 = vld [vmem:[#allocation4 + $0x20] sm:$0xf]
        %v350 = vld [vmem:[#allocation4 + $0x24] sm:$0xf]
        %v351 = vld [vmem:[#allocation4 + $0x28] sm:$0xf]
        %v352 = vld [vmem:[#allocation4 + $0x2c] sm:$0xf]
        %v353 = vld [vmem:[#allocation4 + $0x30] sm:$0xf]
        %v354 = vld [vmem:[#allocation4 + $0x34] sm:$0xf]
        %v355 = vld [vmem:[#allocation4 + $0x38] sm:$0xf]
        %v356 = vld [vmem:[#allocation4 + $0x3c] sm:$0xf]
        %v357 = vld [vmem:[%s2] sm:$0x1]
        %v359 = vlaneseq
        %v360 = vshrl.u32 %v359, 7
        %v361 = vsub.s32 0, %v360
        %v362 = vrot.slane %v357, %v361
        %v380 = vunpack.c.l.b16 %v341
        %v381 = vunpack.c.l.b16 %v342
        %v382 = vunpack.c.l.b16 %v343
        %v383 = vunpack.c.l.b16 %v344
        %v384 = vunpack.c.l.b16 %v345
        %v385 = vunpack.c.l.b16 %v346
        %v386 = vunpack.c.l.b16 %v347
        %v387 = vunpack.c.l.b16 %v348
        %v388 = vunpack.c.l.b16 %v349
        %v389 = vunpack.c.l.b16 %v350
        %v390 = vunpack.c.l.b16 %v351
        %v391 = vunpack.c.l.b16 %v352
        %v392 = vunpack.c.l.b16 %v353
        %v393 = vunpack.c.l.b16 %v354
        %v394 = vunpack.c.l.b16 %v355
        %v395 = vunpack.c.l.b16 %v356
        %v396 = vpack.c.b16 %v381, %v380
        %v397 = vpack.c.b16 %v383, %v382
        %v398 = vpack.c.b16 %v385, %v384
        %v399 = vpack.c.b16 %v387, %v386
        %v400 = vpack.c.b16 %v389, %v388
        %v401 = vpack.c.b16 %v391, %v390
        %v402 = vpack.c.b16 %v393, %v392
        %v403 = vpack.c.b16 %v395, %v394
        %412 = vmatprep.subr.bf16.mxu0 0
        %413 = vmatpush1.bf16.msra.mxu0 %v403
        %414 = vmatprep.subr.bf16.mxu0 0
        %415 = vmatpush1.bf16.msra.mxu0 %v402
        %416 = vmatprep.subr.bf16.mxu0 0
        %417 = vmatpush1.bf16.msra.mxu0 %v401
        %418 = vmatprep.subr.bf16.mxu0 0
        %419 = vmatpush1.bf16.msra.mxu0 %v400
        %420 = vmatprep.subr.bf16.mxu0 0
        %421 = vmatpush1.bf16.msra.mxu0 %v399
        %422 = vmatprep.subr.bf16.mxu0 0
        %423 = vmatpush1.bf16.msra.mxu0 %v398
        %424 = vmatprep.subr.bf16.mxu0 0
        %425 = vmatpush1.bf16.msra.mxu0 %v397
        %426 = vmatprep.subr.bf16.mxu0 0
        %427 = vmatpush1.bf16.msra.mxu0 %v396
        %428 = vmatprep.subr.bf16.mxu0 0
        %429 = vmatpush2.bf16.msra.mxu0 0
        %430 = vmatprep.subr.bf16.mxu0 0
        %431 = vmatpush2.bf16.msra.mxu0 0
        %432 = vmatprep.subr.bf16.mxu0 0
        %433 = vmatpush2.bf16.msra.mxu0 0
        %434 = vmatprep.subr.bf16.mxu0 0
        %435 = vmatpush2.bf16.msra.mxu0 0
        %436 = vmatprep.subr.bf16.mxu0 0
        %437 = vmatpush2.bf16.msra.mxu0 0
        %438 = vmatprep.subr.bf16.mxu0 0
        %439 = vmatpush2.bf16.msra.mxu0 0
        %440 = vmatprep.subr.bf16.mxu0 0
        %441 = vmatpush2.bf16.msra.mxu0 0
        %442 = vmatprep.subr.bf16.mxu0 0
        %443 = vmatpush2.bf16.msra.mxu0 0
        %444 = vmatprep.mubr.bf16.mxu0 0
        %445 = vmatmul.mubr.bf16.gmra.mxu0 %v340
        %v446 = vpop.f32.mrf.mxu0
        %v447 = vadd.f32 %v362, %v446
        %v448 = vpop.f32.mrf.mxu0
        %v449 = vpop.f32.mrf.mxu0
        %v450 = vpop.f32.mrf.mxu0
        %451 = vdwg.mxu0
        %v452 = vmax.f32 %v447, 0.0
        %v453 = vpack.c.bf16 %v452, %v452
        %v454 = vld [vmem:[#allocation6] sm:$0xf]
        %v455 = vld [vmem:[#allocation6 + $0x4] sm:$0xf]
        %v456 = vld [vmem:[#allocation6 + $0x8] sm:$0xf]
        %v457 = vld [vmem:[#allocation6 + $0xc] sm:$0xf]
        %v458 = vld [vmem:[#allocation6 + $0x10] sm:$0xf]
        %v459 = vld [vmem:[#allocation6 + $0x14] sm:$0xf]
        %v460 = vld [vmem:[#allocation6 + $0x18] sm:$0xf]
        %v461 = vld [vmem:[#allocation6 + $0x1c] sm:$0xf]
        %v462 = vld [vmem:[#allocation6 + $0x20] sm:$0xf]
        %v463 = vld [vmem:[#allocation6 + $0x24] sm:$0xf]
        %v464 = vld [vmem:[#allocation6 + $0x28] sm:$0xf]
        %v465 = vld [vmem:[#allocation6 + $0x2c] sm:$0xf]
        %v466 = vld [vmem:[#allocation6 + $0x30] sm:$0xf]
        %v467 = vld [vmem:[#allocation6 + $0x34] sm:$0xf]
        %v468 = vld [vmem:[#allocation6 + $0x38] sm:$0xf]
        %v469 = vld [vmem:[#allocation6 + $0x3c] sm:$0xf]
        %v470 = vld [vmem:[%s4] sm:$0x1]
        %v472 = vlaneseq
        %v473 = vshrl.u32 %v472, 7
        %v474 = vsub.s32 0, %v473
        %v475 = vrot.slane %v470, %v474
        %v493 = vunpack.c.l.b16 %v454
        %v494 = vunpack.c.l.b16 %v455
        %v495 = vunpack.c.l.b16 %v456
        %v496 = vunpack.c.l.b16 %v457
        %v497 = vunpack.c.l.b16 %v458
        %v498 = vunpack.c.l.b16 %v459
        %v499 = vunpack.c.l.b16 %v460
        %v500 = vunpack.c.l.b16 %v461
        %v501 = vunpack.c.l.b16 %v462
        %v502 = vunpack.c.l.b16 %v463
        %v503 = vunpack.c.l.b16 %v464
        %v504 = vunpack.c.l.b16 %v465
        %v505 = vunpack.c.l.b16 %v466
        %v506 = vunpack.c.l.b16 %v467
        %v507 = vunpack.c.l.b16 %v468
        %v508 = vunpack.c.l.b16 %v469
        %v509 = vpack.c.b16 %v494, %v493
        %v510 = vpack.c.b16 %v496, %v495
        %v511 = vpack.c.b16 %v498, %v497
        %v512 = vpack.c.b16 %v500, %v499
        %v513 = vpack.c.b16 %v502, %v501
        %v514 = vpack.c.b16 %v504, %v503
        %v515 = vpack.c.b16 %v506, %v505
        %v516 = vpack.c.b16 %v508, %v507
        %525 = vmatprep.subr.bf16.mxu0 0
        %526 = vmatpush1.bf16.msra.mxu0 %v516
        %527 = vmatprep.subr.bf16.mxu0 0
        %528 = vmatpush1.bf16.msra.mxu0 %v515
        %529 = vmatprep.subr.bf16.mxu0 0
        %530 = vmatpush1.bf16.msra.mxu0 %v514
        %531 = vmatprep.subr.bf16.mxu0 0
        %532 = vmatpush1.bf16.msra.mxu0 %v513
        %533 = vmatprep.subr.bf16.mxu0 0
        %534 = vmatpush1.bf16.msra.mxu0 %v512
        %535 = vmatprep.subr.bf16.mxu0 0
        %536 = vmatpush1.bf16.msra.mxu0 %v511
        %537 = vmatprep.subr.bf16.mxu0 0
        %538 = vmatpush1.bf16.msra.mxu0 %v510
        %539 = vmatprep.subr.bf16.mxu0 0
        %540 = vmatpush1.bf16.msra.mxu0 %v509
        %541 = vmatprep.subr.bf16.mxu0 0
        %542 = vmatpush2.bf16.msra.mxu0 0
        %543 = vmatprep.subr.bf16.mxu0 0
        %544 = vmatpush2.bf16.msra.mxu0 0
        %545 = vmatprep.subr.bf16.mxu0 0
        %546 = vmatpush2.bf16.msra.mxu0 0
        %547 = vmatprep.subr.bf16.mxu0 0
        %548 = vmatpush2.bf16.msra.mxu0 0
        %549 = vmatprep.subr.bf16.mxu0 0
        %550 = vmatpush2.bf16.msra.mxu0 0
        %551 = vmatprep.subr.bf16.mxu0 0
        %552 = vmatpush2.bf16.msra.mxu0 0
        %553 = vmatprep.subr.bf16.mxu0 0
        %554 = vmatpush2.bf16.msra.mxu0 0
        %555 = vmatprep.subr.bf16.mxu0 0
        %556 = vmatpush2.bf16.msra.mxu0 0
        %557 = vmatprep.mubr.bf16.mxu0 0
        %558 = vmatmul.mubr.bf16.gmra.mxu0 %v453
        %v559 = vpop.f32.mrf.mxu0
        %v560 = vadd.f32 %v475, %v559
        %v561 = vpop.f32.mrf.mxu0
        %v562 = vpop.f32.mrf.mxu0
        %v563 = vpop.f32.mrf.mxu0
        %564 = vdwg.mxu0
        %v565 = vmax.f32 %v560, 0.0
        %v566 = vpack.c.bf16 %v565, %v565
        %v567 = vld [vmem:[#allocation7] sm:$0xf]
        %v568 = vld [vmem:[#allocation7 + $0x4] sm:$0xf]
        %v569 = vld [vmem:[#allocation7 + $0x8] sm:$0xf]
        %v570 = vld [vmem:[#allocation7 + $0xc] sm:$0xf]
        %v571 = vld [vmem:[#allocation7 + $0x10] sm:$0xf]
        %v572 = vld [vmem:[#allocation7 + $0x14] sm:$0xf]
        %v573 = vld [vmem:[#allocation7 + $0x18] sm:$0xf]
        %v574 = vld [vmem:[#allocation7 + $0x1c] sm:$0xf]
        %v575 = vld [vmem:[#allocation7 + $0x20] sm:$0xf]
        %v576 = vld [vmem:[#allocation7 + $0x24] sm:$0xf]
        %v577 = vld [vmem:[#allocation7 + $0x28] sm:$0xf]
        %v578 = vld [vmem:[#allocation7 + $0x2c] sm:$0xf]
        %v579 = vld [vmem:[#allocation7 + $0x30] sm:$0xf]
        %v580 = vld [vmem:[#allocation7 + $0x34] sm:$0xf]
        %v581 = vld [vmem:[#allocation7 + $0x38] sm:$0xf]
        %v582 = vld [vmem:[#allocation7 + $0x3c] sm:$0xf]
        %v583 = vld [vmem:[%s6] sm:$0x1]
        %v585 = vlaneseq
        %v586 = vshrl.u32 %v585, 7
        %v587 = vsub.s32 0, %v586
        %v588 = vrot.slane %v583, %v587
        %v606 = vunpack.c.l.b16 %v567
        %v607 = vunpack.c.l.b16 %v568
        %v608 = vunpack.c.l.b16 %v569
        %v609 = vunpack.c.l.b16 %v570
        %v610 = vunpack.c.l.b16 %v571
        %v611 = vunpack.c.l.b16 %v572
        %v612 = vunpack.c.l.b16 %v573
        %v613 = vunpack.c.l.b16 %v574
        %v614 = vunpack.c.l.b16 %v575
        %v615 = vunpack.c.l.b16 %v576
        %v616 = vunpack.c.l.b16 %v577
        %v617 = vunpack.c.l.b16 %v578
        %v618 = vunpack.c.l.b16 %v579
        %v619 = vunpack.c.l.b16 %v580
        %v620 = vunpack.c.l.b16 %v581
        %v621 = vunpack.c.l.b16 %v582
        %v622 = vpack.c.b16 %v607, %v606
        %v623 = vpack.c.b16 %v609, %v608
        %v624 = vpack.c.b16 %v611, %v610
        %v625 = vpack.c.b16 %v613, %v612
        %v626 = vpack.c.b16 %v615, %v614
        %v627 = vpack.c.b16 %v617, %v616
        %v628 = vpack.c.b16 %v619, %v618
        %v629 = vpack.c.b16 %v621, %v620
        %638 = vmatprep.subr.bf16.mxu0 0
        %639 = vmatpush1.bf16.msra.mxu0 %v629
        %640 = vmatprep.subr.bf16.mxu0 0
        %641 = vmatpush1.bf16.msra.mxu0 %v628
        %642 = vmatprep.subr.bf16.mxu0 0
        %643 = vmatpush1.bf16.msra.mxu0 %v627
        %644 = vmatprep.subr.bf16.mxu0 0
        %645 = vmatpush1.bf16.msra.mxu0 %v626
        %646 = vmatprep.subr.bf16.mxu0 0
        %647 = vmatpush1.bf16.msra.mxu0 %v625
        %648 = vmatprep.subr.bf16.mxu0 0
        %649 = vmatpush1.bf16.msra.mxu0 %v624
        %650 = vmatprep.subr.bf16.mxu0 0
        %651 = vmatpush1.bf16.msra.mxu0 %v623
        %652 = vmatprep.subr.bf16.mxu0 0
        %653 = vmatpush1.bf16.msra.mxu0 %v622
        %654 = vmatprep.subr.bf16.mxu0 0
        %655 = vmatpush2.bf16.msra.mxu0 0
        %656 = vmatprep.subr.bf16.mxu0 0
        %657 = vmatpush2.bf16.msra.mxu0 0
        %658 = vmatprep.subr.bf16.mxu0 0
        %659 = vmatpush2.bf16.msra.mxu0 0
        %660 = vmatprep.subr.bf16.mxu0 0
        %661 = vmatpush2.bf16.msra.mxu0 0
        %662 = vmatprep.subr.bf16.mxu0 0
        %663 = vmatpush2.bf16.msra.mxu0 0
        %664 = vmatprep.subr.bf16.mxu0 0
        %665 = vmatpush2.bf16.msra.mxu0 0
        %666 = vmatprep.subr.bf16.mxu0 0
        %667 = vmatpush2.bf16.msra.mxu0 0
        %668 = vmatprep.subr.bf16.mxu0 0
        %669 = vmatpush2.bf16.msra.mxu0 0
        %670 = vmatprep.mubr.bf16.mxu0 0
        %671 = vmatmul.mubr.bf16.gmra.mxu0 %v566
        %v672 = vpop.f32.mrf.mxu0
        %v673 = vadd.f32 %v588, %v672
        %v674 = vpop.f32.mrf.mxu0
        %v675 = vpop.f32.mrf.mxu0
        %v676 = vpop.f32.mrf.mxu0
        %677 = vdwg.mxu0
        %v678 = vxor.u32 %v673, 2147483648
        %v679 = vmul.f32 %v678, 1.442695
        %v680 = vpow.pop %v679
        %v681 = vadd.f32 %v680, 1.0
        %v682 = vrcp.pop %v681
        %v683 = vmul.f32 1.0, %v682
        %v684 = vpack.c.bf16 %v683, %v683
        %685 = vst [vmem:[%s337] sm:$0xf] %v684
        %p686 = scmp.lt.s32.totalorder %s23, 1
        %s687 = scalar_select %p686, %s23, 1
        %s688 = smul.addr %s687, 4
        %s689 = scalar_lea.vmem %s7, %s688
        // Predicated region
        $region65: #{_mlp_forward.1} parent=47 // pred_check
          %p690 = pneg %p193
        $region66: #{_mlp_forward.1} parent=47 // pred_check_branch
          %692 = sbr.rel (%p690) target = $region68
        $region67: #{_mlp_forward.1} parent=47 // pred_region
          _
        $region68: #{_mlp_forward.1} parent=47 // pred_fallthru
          _
      $region48: #{_mlp_forward.1} parent=5 // pred_fallthru
        _
      %p693 = scmp.le.s32.totalorder 2, %s18
      // Predicated region
      $region69: #{_mlp_forward.1} parent=5 // pred_check
        %p694 = pneg %p693
      $region70: #{_mlp_forward.1} parent=5 // pred_check_branch
        %696 = sbr.rel (%p694) target = $region72
      $region71: #{_mlp_forward.1} parent=5 // pred_region
        %s697 = ssub.s32 %s18, 2
        // Predicated region
        $region73: #{_mlp_forward.1} parent=71 // pred_check
          %p698 = pneg %p199
        $region74: #{_mlp_forward.1} parent=71 // pred_check_branch
          %700 = sbr.rel (%p698) target = $region76
        $region75: #{_mlp_forward.1} parent=71 // pred_region
          %p701 = scmp.lt.s32.totalorder %s24, 1
          %s702 = scalar_select %p701, %s24, 1
          %s703 = smul.addr %s702, 4
          %s704 = scalar_lea.vmem %s7, %s703
        $region76: #{_mlp_forward.1} parent=71 // pred_fallthru
          _
      $region72: #{_mlp_forward.1} parent=5 // pred_fallthru
        _
    $region6: #{_mlp_forward.1} parent=1 // loop_footer
      %s22 = sadd.s32 1, %s18
    $region7: #{_mlp_forward.1} parent=1 // loop_footer_branch
      %17 = sbr.rel target = $region3
    $region8: #{_mlp_forward.1} parent=1 // loop_exit
      _
    %705 = vsyncpa [#allocation3], 1
    %s706 = scalar_lea.sflag [#allocation3], 1
    %707 = vsyncpa %s706, 1
    %708 = vsyncpa [#allocation5], 1
    %709 = vsyncpa [#allocation8], 1

</llo_original>
